<compile_context>
chip_gen: v7x
topology: tpu7x:2x2x1
jax: 0.10.0
libtpu: 0.0.40
codegen_flags: <defaults>
</compile_context>

<pallas_src>
import jax
import jax.numpy as jnp
from jax.experimental import pallas as pl
from jax.experimental.pallas import tpu as pltpu


def _centrality_encoding_kernel(dist_ref, emb_ref, out_ref):
    # dist_ref: (TN, N) f32, emb_ref: (max_degree, d_model) f32,
    # out_ref:  (TN, d_model) f32
    d = dist_ref[...]                                                  # (TN, N)
    tn = d.shape[0]
    max_degree = emb_ref.shape[0]

    # degree[n] = #(|d[n, k]| == 1)  -- VPU compare + row reduce.
    # f32 accumulation is exact for counts < 2^24 (degree <= N).
    eq_one = (jnp.abs(d) == jnp.asarray(1.0, d.dtype)).astype(jnp.float32)
    deg = jnp.sum(eq_one, axis=-1, keepdims=True).astype(jnp.int32)    # (TN, 1)
    deg = jnp.minimum(deg, max_degree - 1)                             # OOB clamp

    # Embedding gather as one-hot @ table on the MXU.
    iota = jax.lax.broadcasted_iota(jnp.int32, (tn, max_degree), 1)    # (TN, MD)
    onehot = (deg == iota).astype(jnp.float32)                         # (TN, MD)
    out_ref[...] = jnp.dot(onehot, emb_ref[...],
                           preferred_element_type=jnp.float32)         # (TN, DM)


def _vmem_capacity_bytes():
    try:
        return int(pltpu.get_tpu_info().vmem_capacity_bytes)
    except Exception:
        # Conservative fallback: sizes tiles that fit every TPU generation.
        return 64 << 20


def _pick_row_tile(num_rows, per_row_bytes, table_bytes, tile_budget):
    """Row tile: largest multiple of 8 whose pipelined buffers fit the budget.

    Never falls back to an unbounded full-row block; if the computed tile
    covers all rows we take the full (exempt) dimension, otherwise the grid
    uses pl.cdiv and Pallas masks the last partial tile.
    """
    if num_rows <= 8:
        return num_rows
    tn = (tile_budget - table_bytes) // max(1, per_row_bytes)
    tn = max(8, (tn // 8) * 8)
    if tn >= num_rows:
        return num_rows            # single block == full dim (always legal)
    return tn                      # multiple of 8; tail block masked by Pallas


def centrality_encoding(distances, embedding_table):
    """distances: (B, N, N); embedding_table: (max_degree, d_model) f32.

    Returns (B, N, d_model) f32 = embedding_table[degree], with
    degree[b, n] = #(|distances[b, n, :]| == 1) and OOB degrees clamped to
    max_degree - 1.
    """
    B, N, N2 = distances.shape
    assert N == N2, "distances must be (B, N, N)"
    max_degree, d_model = embedding_table.shape

    dist = distances.astype(jnp.float32)        # no-op for f32 callers
    emb = embedding_table.astype(jnp.float32)

    # Flatten (B, N) -> one row axis: free reshape (row-major contiguous).
    rows = B * N
    dist2d = dist.reshape(rows, N)

    # Per-generation buffer budget.
    vmem_cap = _vmem_capacity_bytes()
    big_vmem = vmem_cap >= (96 << 20)           # v5e / v6e: 128 MiB per core
    tile_budget = (24 << 20) if big_vmem else (12 << 20)
    limit_cap = (100 << 20) if big_vmem else (48 << 20)

    table_bytes = max_degree * d_model * 4          # single-buffered
    per_row_bytes = 2 * N * 4 + 2 * d_model * 4     # dbl-buffered dist + out
    tn = _pick_row_tile(rows, per_row_bytes, table_bytes, tile_budget)

    vmem_needed = tn * per_row_bytes + table_bytes
    vmem_limit = int(min(max(vmem_needed + (4 << 20), 16 << 20), limit_cap))

    grid = (pl.cdiv(rows, tn),)

    out2d = pl.pallas_call(
        _centrality_encoding_kernel,
        out_shape=jax.ShapeDtypeStruct((rows, d_model), jnp.float32),
        grid_spec=pltpu.PrefetchScalarGridSpec(
            num_scalar_prefetch=0,
            grid=grid,
            in_specs=[
                pl.BlockSpec((tn, N), lambda r: (r, 0)),
                # Constant index_map -> fetched once; single-buffer it.
                pl.BlockSpec((max_degree, d_model), lambda r: (0, 0),
                             pipeline_mode=pl.Buffered(1)),
            ],
            out_specs=pl.BlockSpec((tn, d_model), lambda r: (r, 0)),
        ),
        compiler_params=pltpu.CompilerParams(
            dimension_semantics=("parallel",),
            vmem_limit_bytes=vmem_limit,
        ),
    )(dist2d, emb)

    return out2d.reshape(B, N, d_model)


def reference(distances, embedding_table):
    cent = jnp.sum((jnp.abs(distances) == 1.0).astype(jnp.float32), axis=-1)
    return embedding_table[cent.astype(jnp.int32)].astype(jnp.float32)


if __name__ == "__main__":
    key = jax.random.PRNGKey(0)
    k_dist, k_emb = jax.random.split(key)

    B, N = 2, 16          # batch, number of nodes
    max_degree = 32       # exceeds max possible degree (N)
    d_model = 32

    # Integer-valued distances so the |d| == 1 comparison is exact.
    distances = jax.random.randint(
        k_dist, (B, N, N), minval=-3, maxval=4).astype(jnp.float32)
    embedding_table = jax.random.normal(
        k_emb, (max_degree, d_model), dtype=jnp.float32)

    out = centrality_encoding(distances, embedding_table)
    out = jax.block_until_ready(out)

    ref = reference(distances, embedding_table)
    assert out.shape == (B, N, d_model)
    assert out.dtype == jnp.float32
    assert jnp.allclose(out, ref, atol=1e-5, rtol=1e-5)

    print("KERNEL_OK")
</pallas_src>

<mosaic_0001>
module attributes {stable_mosaic.version = 11 : i64} {
  func.func @_centrality_encoding_kernel(%arg0: i32, %arg1: memref<32x16xf32, #tpu.memory_space<vmem>>, %arg2: memref<32x32xf32, #tpu.memory_space<vmem>>, %arg3: memref<32x32xf32, #tpu.memory_space<vmem>>) attributes {dimension_semantics = [#tpu.dimension_semantics<parallel>], iteration_bounds = array<i64: 1>, scalar_prefetch = 0 : i64, scratch_operands = 0 : i64, tpu.core_type = #tpu.core_type<tc>, window_params = [{transform_indices = @transform_0, window_bounds = array<i64: 32, 16>}, {pipeline_mode = #tpu.pipeline_mode<synchronous>, transform_indices = @transform_1, window_bounds = array<i64: 32, 32>}, {transform_indices = @transform_2, window_bounds = array<i64: 32, 32>}]} {
    %c0 = arith.constant 0 : index
    %c0_0 = arith.constant 0 : index
    %0 = vector.load %arg1[%c0, %c0_0] : memref<32x16xf32, #tpu.memory_space<vmem>>, vector<32x16xf32>
    %1 = math.absf %0 : vector<32x16xf32>
    %cst = arith.constant 1.000000e+00 : f32
    %2 = vector.broadcast %cst : f32 to vector<32x16xf32>
    %3 = arith.cmpf oeq, %1, %2 : vector<32x16xf32>
    %4 = arith.extui %3 : vector<32x16xi1> to vector<32x16xi32>
    %5 = arith.sitofp %4 : vector<32x16xi32> to vector<32x16xf32>
    %cst_1 = arith.constant dense<0.000000e+00> : vector<32xf32>
    %6 = vector.multi_reduction <add>, %5, %cst_1 [1] : vector<32x16xf32> to vector<32xf32>
    %7 = vector.shape_cast %6 : vector<32xf32> to vector<32x1xf32>
    %8 = arith.fptosi %7 : vector<32x1xf32> to vector<32x1xi32>
    %c31_i32 = arith.constant 31 : i32
    %9 = vector.broadcast %c31_i32 : i32 to vector<32x1xi32>
    %10 = arith.minsi %8, %9 : vector<32x1xi32>
    %11 = tpu.iota {dimensions = array<i32: 1>} : vector<32x32xi32>
    %12 = vector.broadcast %10 : vector<32x1xi32> to vector<32x32xi32>
    %13 = arith.cmpi eq, %12, %11 : vector<32x32xi32>
    %14 = arith.extui %13 : vector<32x32xi1> to vector<32x32xi32>
    %15 = arith.sitofp %14 : vector<32x32xi32> to vector<32x32xf32>
    %c0_2 = arith.constant 0 : index
    %c0_3 = arith.constant 0 : index
    %16 = vector.load %arg2[%c0_2, %c0_3] : memref<32x32xf32, #tpu.memory_space<vmem>>, vector<32x32xf32>
    %cst_4 = arith.constant dense<0.000000e+00> : vector<32x32xf32>
    %17 = tpu.matmul %15, %16, %cst_4 {dimension_numbers = #tpu.dot_dimension_numbers<[1], [0], [0], [1], [0, 0, 1, 1], [], []>} : vector<32x32xf32>, vector<32x32xf32>, vector<32x32xf32> -> vector<32x32xf32>
    %c0_5 = arith.constant 0 : index
    %c0_6 = arith.constant 0 : index
    %18 = vector.load %arg3[%c0_5, %c0_6] : memref<32x32xf32, #tpu.memory_space<vmem>>, vector<32x32xf32>
    tpu.vector_store %arg3[%c0_5, %c0_6], %17 {strides = array<i32>} : memref<32x32xf32, #tpu.memory_space<vmem>>, vector<32x32xf32>,
    return
  }
  func.func @transform_0(%arg0: i32) -> (i32, i32) {
    %c0_i32 = arith.constant 0 : i32
    %c0_i32_0 = arith.constant 0 : i32
    return %arg0, %c0_i32 : i32, i32
  }
  func.func @transform_1(%arg0: i32) -> (i32, i32) {
    %c0_i32 = arith.constant 0 : i32
    %c0_i32_0 = arith.constant 0 : i32
    %c0_i32_1 = arith.constant 0 : i32
    return %c0_i32, %c0_i32_0 : i32, i32
  }
  func.func @transform_2(%arg0: i32) -> (i32, i32) {
    %c0_i32 = arith.constant 0 : i32
    %c0_i32_0 = arith.constant 0 : i32
    return %arg0, %c0_i32 : i32, i32
  }
}

</mosaic_0001>

<llo_original>
// kernel: tpu_custom_call.1
$region0: #{tpu_custom_call.1}
  #allocation0 [shape = 'u32[]', space=smem, size = 0x4, offset = 0x4, fixed_abs, tag = 'smem constant byte address 0x4 - core index']
  #allocation1 [shape = 'u32[144,128]{1,0:T(1,128)}', space=vmem, size = 0x12000, scoped, tag = 'internal scratch']
  %s0 = inlined_call_operand.vmem [shape: f32[32,16], index: 0, kind: input, shape index: {}]
  %s1 = inlined_call_operand.vmem [shape: f32[32,32], index: 1, kind: input, shape index: {}]
  %s2 = inlined_call_operand.hbm [shape: f32[32,32], index: 2, kind: output, shape index: {}]
  %s3 = sld [smem:[#allocation0]]
  $region18: #{tpu_custom_call.1} parent=0
    _
  %s5 = ssub.s32 1, %s3
  %s6 = scalar_select 0, %s5, %s3
  $region1: #{tpu_custom_call.1} parent=0
    #allocation2 [shape = 'u8[16384]{0}', space=vmem, size = 0x4000, scoped, tag = 'output window, operand 0, single buffered']
    #allocation3 [shape = 's32[1]{0}', space=sflag, size = 0x4, scoped, tag = 'scoped memory for tpu_custom_call.1']
    %7 = vsyncpa [#allocation3], 0
    // Predicated region
    $region2: #{tpu_custom_call.1} parent=1 // pred_check
      _
    $region3: #{tpu_custom_call.1} parent=1 // pred_check_branch
      %9 = sbr.rel (0) target = $region5
    $region4: #{tpu_custom_call.1} parent=1 // pred_region
      _
    $region5: #{tpu_custom_call.1} parent=1 // pred_fallthru
      _
    // Predicated region
    $region6: #{tpu_custom_call.1} parent=1 // pred_check
      _
    $region7: #{tpu_custom_call.1} parent=1 // pred_check_branch
      %11 = sbr.rel (0) target = $region9
    $region8: #{tpu_custom_call.1} parent=1 // pred_region
      _
    $region9: #{tpu_custom_call.1} parent=1 // pred_fallthru
      _
    %v12 = vld [vmem:[%s0] sm:$0xff]
    %v13 = vld [vmem:[%s0 + $0x8] sm:$0xff]
    %v14 = vld [vmem:[%s0 + $0x10] sm:$0xff]
    %v15 = vld [vmem:[%s0 + $0x18] sm:$0xff]
    %v16 = vand.u32 2147483647, %v12
    %v17 = vand.u32 2147483647, %v13
    %v18 = vand.u32 2147483647, %v14
    %v19 = vand.u32 2147483647, %v15
    %vm20 = vcmp.eq.f32.partialorder %v16, 1.0
    %vm21 = vcmp.eq.f32.partialorder %v17, 1.0
    %vm22 = vcmp.eq.f32.partialorder %v18, 1.0
    %vm23 = vcmp.eq.f32.partialorder %v19, 1.0
    %v24 = vsel %vm20, 1, 0
    %v25 = vsel %vm21, 1, 0
    %v26 = vsel %vm22, 1, 0
    %v27 = vsel %vm23, 1, 0
    %v28 = vcvt.s32.f32 %v24
    %v29 = vcvt.s32.f32 %v25
    %v30 = vcvt.s32.f32 %v26
    %v31 = vcvt.s32.f32 %v27
    %vm32 = vcmask 130048
    %v33 = vsel %vm32, %v28, 0.0
    %34 = vadd.xlane.f32.xlu0 %v33
    %v35 = vpop.xlane.xlu0 %34
    %v36 = vsel %vm32, %v29, 0.0
    %37 = vadd.xlane.f32.xlu0 %v36
    %v38 = vpop.xlane.xlu0 %37
    %v39 = vsel %vm32, %v30, 0.0
    %40 = vadd.xlane.f32.xlu0 %v39
    %v41 = vpop.xlane.xlu0 %40
    %v42 = vsel %vm32, %v31, 0.0
    %43 = vadd.xlane.f32.xlu0 %v42
    %v44 = vpop.xlane.xlu0 %43
    %v45 = vcvt.f32.s32.to.zero.pseudo %v35
    %v46 = vcvt.f32.s32.to.zero.pseudo %v38
    %v47 = vcvt.f32.s32.to.zero.pseudo %v41
    %v48 = vcvt.f32.s32.to.zero.pseudo %v44
    %vm49 = vcmp.lt.s32.totalorder %v45, 31
    %v50 = vsel %vm49, %v45, 31
    %vm51 = vcmp.lt.s32.totalorder %v46, 31
    %v52 = vsel %vm51, %v46, 31
    %vm53 = vcmp.lt.s32.totalorder %v47, 31
    %v54 = vsel %vm53, %v47, 31
    %vm55 = vcmp.lt.s32.totalorder %v48, 31
    %v56 = vsel %vm55, %v48, 31
    %v57 = vlaneseq
    %v58 = vand.u32 %v57, 127
    %vm59 = vcmp.eq.s32.totalorder %v50, %v58
    %vm60 = vcmp.eq.s32.totalorder %v52, %v58
    %vm61 = vcmp.eq.s32.totalorder %v54, %v58
    %vm62 = vcmp.eq.s32.totalorder %v56, %v58
    %v63 = vsel %vm59, 1, 0
    %v64 = vsel %vm60, 1, 0
    %v65 = vsel %vm61, 1, 0
    %v66 = vsel %vm62, 1, 0
    %v67 = vcvt.s32.f32 %v63
    %v68 = vcvt.s32.f32 %v64
    %v69 = vcvt.s32.f32 %v65
    %v70 = vcvt.s32.f32 %v66
    %v71 = vld [vmem:[%s1] sm:$0xff]
    %v72 = vld [vmem:[%s1 + $0x8] sm:$0xff]
    %v73 = vld [vmem:[%s1 + $0x10] sm:$0xff]
    %v74 = vld [vmem:[%s1 + $0x18] sm:$0xff]
    %vm75 = vcmask 261120
    %v77 = vsel %vm75, %v67, 0
    %v80 = vsel %vm75, %v68, 0
    %v83 = vsel %vm75, %v69, 0
    %v86 = vsel %vm75, %v70, 0
    %88 = vmatprep.subr.mxu0 0.0
    %89 = vmatpush1.msra.mxu0 %v71
    %90 = vmatprep.subr.mxu0 0.0
    %91 = vmatpush1.msra.mxu0 %v72
    %92 = vmatprep.subr.mxu0 0.0
    %93 = vmatpush1.msra.mxu0 %v73
    %94 = vmatprep.subr.mxu0 0.0
    %95 = vmatpush1.msra.mxu0 %v74
    %96 = vmatprep.subr.mxu0 0.0
    %97 = vmatpush1.msra.mxu0 0.0
    %98 = vmatprep.subr.mxu0 0.0
    %99 = vmatpush1.msra.mxu0 0.0
    %100 = vmatprep.subr.mxu0 0.0
    %101 = vmatpush1.msra.mxu0 0.0
    %102 = vmatprep.subr.mxu0 0.0
    %103 = vmatpush1.msra.mxu0 0.0
    %104 = vmatprep.subr.mxu0 0.0
    %105 = vmatpush1.msra.mxu0 0.0
    %106 = vmatprep.subr.mxu0 0.0
    %107 = vmatpush1.msra.mxu0 0.0
    %108 = vmatprep.subr.mxu0 0.0
    %109 = vmatpush1.msra.mxu0 0.0
    %110 = vmatprep.subr.mxu0 0.0
    %111 = vmatpush1.msra.mxu0 0.0
    %112 = vmatprep.subr.mxu0 0.0
    %113 = vmatpush1.msra.mxu0 0.0
    %114 = vmatprep.subr.mxu0 0.0
    %115 = vmatpush1.msra.mxu0 0.0
    %116 = vmatprep.subr.mxu0 0.0
    %117 = vmatpush1.msra.mxu0 0.0
    %118 = vmatprep.subr.mxu0 0.0
    %119 = vmatpush1.msra.mxu0 0.0
    %120 = vmatprep.subr.mxu0 0.0
    %121 = vmatpush1.msra.mxu0 0.0
    %122 = vmatprep.subr.mxu0 0.0
    %123 = vmatpush1.msra.mxu0 0.0
    %124 = vmatprep.subr.mxu0 0.0
    %125 = vmatpush1.msra.mxu0 0.0
    %126 = vmatprep.subr.mxu0 0.0
    %127 = vmatpush1.msra.mxu0 0.0
    %128 = vmatprep.subr.mxu0 0.0
    %129 = vmatpush1.msra.mxu0 0.0
    %130 = vmatprep.subr.mxu0 0.0
    %131 = vmatpush1.msra.mxu0 0.0
    %132 = vmatprep.subr.mxu0 0.0
    %133 = vmatpush1.msra.mxu0 0.0
    %134 = vmatprep.subr.mxu0 0.0
    %135 = vmatpush1.msra.mxu0 0.0
    %136 = vmatprep.subr.mxu0 0.0
    %137 = vmatpush1.msra.mxu0 0.0
    %138 = vmatprep.subr.mxu0 0.0
    %139 = vmatpush1.msra.mxu0 0.0
    %140 = vmatprep.subr.mxu0 0.0
    %141 = vmatpush1.msra.mxu0 0.0
    %142 = vmatprep.subr.mxu0 0.0
    %143 = vmatpush1.msra.mxu0 0.0
    %144 = vmatprep.subr.mxu0 0.0
    %145 = vmatpush1.msra.mxu0 0.0
    %146 = vmatprep.subr.mxu0 0.0
    %147 = vmatpush1.msra.mxu0 0.0
    %148 = vmatprep.subr.mxu0 0.0
    %149 = vmatpush1.msra.mxu0 0.0
    %150 = vmatprep.subr.mxu0 0.0
    %151 = vmatpush1.msra.mxu0 0.0
    %152 = vmatprep.mubr.f32.mxu0 0.0
    %153 = vmatmul.mubr.f32.gmra.mrb[0].mxu0 %v77
    %v154 = vpop.f32.mrb[0].mxu0
    %v155 = vadd.f32 0.0, %v154
    %v156 = vpop.f32.mrb[0].mxu0
    %157 = vmatprep.mubr.f32.mxu0 0.0
    %158 = vmatmul.mubr.f32.gmra.mrb[0].mxu0 %v80
    %v159 = vpop.f32.mrb[0].mxu0
    %v160 = vadd.f32 0.0, %v159
    %v161 = vpop.f32.mrb[0].mxu0
    %162 = vmatprep.mubr.f32.mxu0 0.0
    %163 = vmatmul.mubr.f32.gmra.mrb[0].mxu0 %v83
    %v164 = vpop.f32.mrb[0].mxu0
    %v165 = vadd.f32 0.0, %v164
    %v166 = vpop.f32.mrb[0].mxu0
    %167 = vmatprep.mubr.f32.mxu0 0.0
    %168 = vmatmul.mubr.f32.gmra.mrb[0].mxu0 %v86
    %v169 = vpop.f32.mrb[0].mxu0
    %v170 = vadd.f32 0.0, %v169
    %v171 = vpop.f32.mrb[0].mxu0
    %172 = vdwg.mxu0
    %173 = vst.msk [vmem:[#allocation2] sm:$0xff] %vm75, %v155
    %174 = vst.msk [vmem:[#allocation2 + $0x8] sm:$0xff] %vm75, %v160
    %175 = vst.msk [vmem:[#allocation2 + $0x10] sm:$0xff] %vm75, %v165
    %176 = vst.msk [vmem:[#allocation2 + $0x18] sm:$0xff] %vm75, %v170
    // Predicated region
    $region10: #{tpu_custom_call.1} parent=1 // pred_check
      _
    $region11: #{tpu_custom_call.1} parent=1 // pred_check_branch
      %178 = sbr.rel (0) target = $region13
    $region12: #{tpu_custom_call.1} parent=1 // pred_region
      %s180 = ssub.s32 512, 512
      %181 = vsyncadd [#allocation3], %s180
      %s182 = sshll.u32 [#allocation2], 4
      %s183 = int_to_ptr.vmem [resolvable:$true] %s182
      %188 = dma.vmem_to_hbm [thread:$0]  %s183, 512, %s2, [#allocation3], 128, 128, 8
    $region13: #{tpu_custom_call.1} parent=1 // pred_fallthru
      _
    // Predicated region
    $region14: #{tpu_custom_call.1} parent=1 // pred_check
      _
    $region15: #{tpu_custom_call.1} parent=1 // pred_check_branch
      %190 = sbr.rel (0) target = $region17
    $region16: #{tpu_custom_call.1} parent=1 // pred_region
      %191 = dma.done [#allocation3], 512
    $region17: #{tpu_custom_call.1} parent=1 // pred_fallthru
      _
    %192 = vsyncpa [#allocation3], 1

</llo_original>
